<compile_context>
chip_gen: v6e
topology: v6e:2x2x1
jax: 0.10.0
libtpu: 0.0.40
codegen_flags: <defaults>
</compile_context>

<pallas_src>
import jax
import jax.numpy as jnp
from jax.experimental import pallas as pl
from jax.experimental.pallas import tpu as pltpu

_LANES = 128
_MIB = 1024 * 1024
# Candidate widths for the dense view, widest first: a wide lane-dense output
# slab is the single biggest measured lever for copy-like kernels.
_LANE_WIDTHS = (4096, 2048, 1024, 512, 256, 128)


def _copy_kernel(x_ref, o_ref):
    # Identity copy of one lane/sublane-dense (tile_rows, lane_w) tile.
    o_ref[...] = x_ref[...]


def _vmem_capacity_bytes() -> int:
    """Generation-aware VMEM capacity; conservative 64 MiB (v7x/TC) fallback."""
    try:
        info = pltpu.get_tpu_info()
        cap = int(getattr(info, "vmem_capacity_bytes", 0) or 0)
        if cap > 0:
            return cap
    except Exception:
        pass
    return 64 * _MIB


def _sublane_pack(dtype) -> int:
    # Full-vreg sublane granularity: 8 (f32/i32), 16 (bf16/f16), 32 (i8/fp8).
    itemsize = jnp.dtype(dtype).itemsize
    return max(8, 32 // itemsize)


def flatten_forward(x: jax.Array, use_kernel: bool = True,
                    donate_input: bool = False) -> jax.Array:
    """Equivalent of torch `input.view(input.size(0), -1)`.

    use_kernel=False is the recommended zero-cost path (reshape is
    metadata-only).  use_kernel=True routes the flattened slab through a
    tiled, pipelined Pallas copy kernel (useful only as a fusion anchor).
    donate_input=True adds input_output_aliases={0: 0}; enable only under jit
    when the caller donates x (eagerly XLA would insert a defensive copy).
    """
    n = x.shape[0]
    f = 1
    for d in x.shape[1:]:
        f *= d

    # Row-major collapse — metadata-only in XLA; this already *is* the answer.
    out2d = x.reshape(n, f)
    if not use_kernel:
        return out2d

    itemsize = jnp.dtype(x.dtype).itemsize
    pack = _sublane_pack(x.dtype)
    total = n * f

    if total == 0 or total % (pack * _LANES) != 0:
        # Can't repack into a full (pack, 128) dense slab without padding; the
        # reshape above is exact and free, so return it directly.
        # TODO(synk): add a pad-and-slice copy path for unaligned sizes.
        return out2d

    # ---- wide, lane-dense 2-D view of the contiguous data (free plumbing) ----
    lane_w = _LANES
    for w in _LANE_WIDTHS:
        if total % w == 0 and (total // w) % pack == 0:
            lane_w = w
            break
    rows = total // lane_w                      # multiple of `pack`

    # ---- generation-aware tile sizing ----
    vmem_cap = _vmem_capacity_bytes()
    # 8 MiB/buffer on 128-MiB-VMEM parts (v5e/v6e), 4 MiB on v7x (64 MiB/TC):
    # in + out, double-buffered => 32 MiB / 16 MiB pipelined footprint.
    target_tile_bytes = 8 * _MIB if vmem_cap >= 100 * _MIB else 4 * _MIB

    row_bytes = lane_w * itemsize
    cap_rows = max(pack, (target_tile_bytes // row_bytes) // pack * pack)
    cap_rows = min(cap_rows, rows)

    # Largest tile_rows <= cap_rows that is a multiple of `pack` AND evenly
    # divides `rows` — every grid step is a full-rate, unmasked tile.
    m = rows // pack
    tile_rows = pack
    d = cap_rows // pack
    while d >= 1:
        if m % d == 0:
            tile_rows = d * pack
            break
        d -= 1

    grid = (rows // tile_rows,)
    tile_bytes = tile_rows * row_bytes
    # Cover the in+out double-buffered footprint with headroom; this exceeds
    # the 16/32 MiB scoped defaults when the big tiles need it, and stays far
    # below physical VMEM on every generation (<= ~36 MiB vs 64/128 MiB).
    vmem_limit = max(4 * tile_bytes + 4 * _MIB, 32 * _MIB)

    x_dense = out2d.reshape(rows, lane_w)

    extra_kwargs = {}
    if donate_input:
        extra_kwargs["input_output_aliases"] = {0: 0}

    y_dense = pl.pallas_call(
        _copy_kernel,
        out_shape=jax.ShapeDtypeStruct((rows, lane_w), x.dtype),
        grid=grid,
        in_specs=[pl.BlockSpec((tile_rows, lane_w), lambda i: (i, 0))],
        out_specs=pl.BlockSpec((tile_rows, lane_w), lambda i: (i, 0)),
        compiler_params=pltpu.CompilerParams(
            # TODO(synk): if xprof shows one v7x TensorCore idle, switch this
            # axis to pltpu.CORE_PARALLEL; "parallel" is a safe no-op on
            # single-TC v5e/v6e.
            dimension_semantics=("parallel",),
            vmem_limit_bytes=int(vmem_limit),
        ),
        cost_estimate=pl.CostEstimate(
            flops=0,
            transcendentals=0,
            bytes_accessed=2 * total * itemsize,
        ),
        **extra_kwargs,
    )(x_dense)

    return y_dense.reshape(n, f)


if __name__ == "__main__":
    key = jax.random.PRNGKey(0)

    # Small NCHW input consistent with a PointNet-style feature map.
    N, C, H, W = 2, 4, 16, 16
    x = jax.random.normal(key, (N, C, H, W), dtype=jnp.float32)

    # Exercise the Pallas copy path (f32, narrow slab -> lane_w=256 here).
    y = jax.block_until_ready(flatten_forward(x, use_kernel=True))
    y_ref = x.reshape(N, C * H * W)
    assert y.shape == (N, C * H * W), y.shape
    assert y.dtype == x.dtype
    assert jnp.array_equal(y, y_ref)

    # Recommended zero-copy path.
    y_fast = jax.block_until_ready(flatten_forward(x, use_kernel=False))
    assert jnp.array_equal(y_fast, y_ref)

    # Exercise the dtype-aware packing + wide-lane (4096) path with bf16.
    x2 = jax.random.normal(jax.random.PRNGKey(1), (4, 32, 32, 32),
                           dtype=jnp.bfloat16)
    y2 = jax.block_until_ready(flatten_forward(x2, use_kernel=True))
    assert jnp.array_equal(y2, x2.reshape(4, 32 * 32 * 32))

    print("KERNEL_OK")
</pallas_src>

<mosaic_0001>
module attributes {stable_mosaic.version = 11 : i64} {
  func.func @_copy_kernel(%arg0: i32, %arg1: memref<8x256xf32, #tpu.memory_space<vmem>>, %arg2: memref<8x256xf32, #tpu.memory_space<vmem>>) attributes {dimension_semantics = [#tpu.dimension_semantics<parallel>], iteration_bounds = array<i64: 1>, scalar_prefetch = 0 : i64, scratch_operands = 0 : i64, tpu.core_type = #tpu.core_type<tc>, window_params = [{transform_indices = @transform_0, window_bounds = array<i64: 8, 256>}, {transform_indices = @transform_1, window_bounds = array<i64: 8, 256>}]} {
    %c0 = arith.constant 0 : index
    %c0_0 = arith.constant 0 : index
    %0 = vector.load %arg1[%c0, %c0_0] : memref<8x256xf32, #tpu.memory_space<vmem>>, vector<8x256xf32>
    %c0_1 = arith.constant 0 : index
    %c0_2 = arith.constant 0 : index
    %1 = vector.load %arg2[%c0_1, %c0_2] : memref<8x256xf32, #tpu.memory_space<vmem>>, vector<8x256xf32>
    tpu.vector_store %arg2[%c0_1, %c0_2], %0 {strides = array<i32>} : memref<8x256xf32, #tpu.memory_space<vmem>>, vector<8x256xf32>,
    return
  }
  func.func @transform_0(%arg0: i32) -> (i32, i32) {
    %c0_i32 = arith.constant 0 : i32
    %c0_i32_0 = arith.constant 0 : i32
    return %arg0, %c0_i32 : i32, i32
  }
  func.func @transform_1(%arg0: i32) -> (i32, i32) {
    %c0_i32 = arith.constant 0 : i32
    %c0_i32_0 = arith.constant 0 : i32
    return %arg0, %c0_i32 : i32, i32
  }
}

</mosaic_0001>

<llo_original>
// kernel: tpu_custom_call.1
$region0: #{tpu_custom_call.1}
  #allocation0 [shape = 'u32[]', space=smem, size = 0x4, offset = 0x4, fixed_abs, tag = 'smem constant byte address 0x4 - core index']
  #allocation1 [shape = 'u32[144,128]{1,0:T(1,128)}', space=vmem, size = 0x12000, scoped, tag = 'internal scratch']
  %s0 = inlined_call_operand.hbm [shape: f32[8,256], index: 0, kind: input, shape index: {}]
  %s1 = inlined_call_operand.hbm [shape: f32[8,256], index: 1, kind: output, shape index: {}]
  %s2 = sld [smem:[#allocation0]]
  $region18: #{tpu_custom_call.1} parent=0
    _
  %s4 = ssub.s32 1, %s2
  %s5 = scalar_select 0, %s4, %s2
  $region1: #{tpu_custom_call.1} parent=0
    #allocation2 [shape = 'u8[8192]{0}', space=vmem, size = 0x2000, scoped, tag = 'input window, operand 0, single buffered']
    #allocation3 [shape = 's32[1]{0}', space=sflag, size = 0x4, scoped, tag = 'scoped memory for tpu_custom_call.1']
    #allocation4 [shape = 's32[1]{0}', space=sflag, size = 0x4, scoped, tag = 'scoped memory for tpu_custom_call.1']
    #allocation5 [shape = 'u8[8192]{0}', space=vmem, size = 0x2000, scoped, tag = 'output window, operand 0, single buffered']
    %6 = vsyncpa [#allocation3], 0
    %7 = vsyncpa [#allocation4], 0
    // Predicated region
    $region2: #{tpu_custom_call.1} parent=1 // pred_check
      _
    $region3: #{tpu_custom_call.1} parent=1 // pred_check_branch
      %9 = sbr.rel (0) target = $region5
    $region4: #{tpu_custom_call.1} parent=1 // pred_region
      %s11 = ssub.s32 256, 256
      %12 = vsyncadd [#allocation3], %s11
      %s14 = sshll.u32 [#allocation2], 4
      %s15 = int_to_ptr.vmem [resolvable:$true] %s14
      %17 = dma.hbm_to_vmem [thread:$0]  %s0, 256, %s15, [#allocation3]
    $region5: #{tpu_custom_call.1} parent=1 // pred_fallthru
      _
    // Predicated region
    $region6: #{tpu_custom_call.1} parent=1 // pred_check
      _
    $region7: #{tpu_custom_call.1} parent=1 // pred_check_branch
      %19 = sbr.rel (0) target = $region9
    $region8: #{tpu_custom_call.1} parent=1 // pred_region
      %20 = dma.done [#allocation3], 256
    $region9: #{tpu_custom_call.1} parent=1 // pred_fallthru
      _
    %v21 = vld [vmem:[#allocation2] sm:$0xff]
    %v22 = vld [vmem:[#allocation2 + $0x8] sm:$0xff]
    %23 = vst [vmem:[#allocation5] sm:$0xff] %v21
    %24 = vst [vmem:[#allocation5 + $0x8] sm:$0xff] %v22
    // Predicated region
    $region10: #{tpu_custom_call.1} parent=1 // pred_check
      _
    $region11: #{tpu_custom_call.1} parent=1 // pred_check_branch
      %26 = sbr.rel (0) target = $region13
    $region12: #{tpu_custom_call.1} parent=1 // pred_region
      %s28 = ssub.s32 256, 256
      %29 = vsyncadd [#allocation4], %s28
      %s31 = sshll.u32 [#allocation5], 4
      %s32 = int_to_ptr.vmem [resolvable:$true] %s31
      %34 = dma.vmem_to_hbm [thread:$0]  %s32, 256, %s1, [#allocation4]
    $region13: #{tpu_custom_call.1} parent=1 // pred_fallthru
      _
    // Predicated region
    $region14: #{tpu_custom_call.1} parent=1 // pred_check
      _
    $region15: #{tpu_custom_call.1} parent=1 // pred_check_branch
      %36 = sbr.rel (0) target = $region17
    $region16: #{tpu_custom_call.1} parent=1 // pred_region
      %37 = dma.done [#allocation4], 256
    $region17: #{tpu_custom_call.1} parent=1 // pred_fallthru
      _
    %38 = vsyncpa [#allocation3], 1
    %39 = vsyncpa [#allocation4], 1

</llo_original>
